<compile_context>
chip_gen: v6e
topology: v6e:2x2x1
jax: 0.10.0
libtpu: 0.0.40
codegen_flags: <defaults>
</compile_context>

<pallas_src>
import jax
import jax.numpy as jnp
from jax.experimental import pallas as pl
from jax.experimental.pallas import tpu as pltpu

N = 7            # observation dim
H1 = 128         # first hidden
H2 = 64          # second hidden
OUT = N * N      # 49
OUT_PAD = 64     # logits padded 49 -> 64 (half the HBM of padding to 128)
NEG_INF = -1e30  # bias for padded logit columns -> exp underflows to exactly 0
TILE_B_MAX = 8192


def _round_up(x, m):
    return (x + m - 1) // m * m


def _cdiv(a, b):
    return -(-a // b)


def policy_kernel(x_ref, w1_ref, b1_ref, w2_ref, b2_ref, w3_ref, b3_ref, o_ref):
    x = x_ref[...]                                                   # (TB, 7)  f32 or bf16

    # Linear(7 -> 128) + ReLU; MXU accumulates in f32, bias/ReLU in f32.
    h1 = jnp.dot(x, w1_ref[...], preferred_element_type=jnp.float32) + b1_ref[...]
    h1 = jnp.maximum(h1, 0.0)                                        # (TB, 128) f32

    # Linear(128 -> 64) + ReLU (activations re-narrowed only if weights are bf16).
    h2 = jnp.dot(h1.astype(w2_ref.dtype), w2_ref[...],
                 preferred_element_type=jnp.float32) + b2_ref[...]
    h2 = jnp.maximum(h2, 0.0)                                        # (TB, 64)  f32

    # Linear(64 -> 64 padded); padded columns: zero weights + -1e30 bias.
    logits = jnp.dot(h2.astype(w3_ref.dtype), w3_ref[...],
                     preferred_element_type=jnp.float32) + b3_ref[...]   # (TB, 64)

    # Numerically stable softmax; padded columns exp() to 0, so the
    # normalization is exactly over the real 49 logits.
    m = jnp.max(logits, axis=-1, keepdims=True)
    e = jnp.exp(logits - m)
    denom = jnp.sum(e, axis=-1, keepdims=True)
    # Exact reciprocal keeps 1e-5 parity with the f32 reference.
    o_ref[...] = (e * pl.reciprocal(denom, approx=False)).astype(o_ref.dtype)


def policy_forward(x, params, *, tile_b_max=TILE_B_MAX, use_bf16=False):
    """x: (B, 7) f32; params as produced by init_params. Returns (B, 49) f32."""
    w1, b1, w2, b2, w3, b3 = params
    B = x.shape[0]

    mm_dtype = jnp.bfloat16 if use_bf16 else jnp.float32
    sub = 16 if use_bf16 else 8                      # sublane multiple for the batch tile

    tile_cap = (tile_b_max // sub) * sub             # floor to a legal multiple
    if tile_cap < sub:
        raise ValueError(f"tile_b_max must be >= {sub}")

    # Pad only the logits head 49 -> 64; x and w1 stay unpadded (K=7 is fine).
    w3p = jnp.pad(w3, ((0, 0), (0, OUT_PAD - OUT)))                        # (64, 64)
    b3p = jnp.pad(b3, ((0, 0), (0, OUT_PAD - OUT)), constant_values=NEG_INF)  # (1, 64)

    x_p = x.astype(mm_dtype)                         # (B, 7)
    w1c = w1.astype(mm_dtype)
    w2c = w2.astype(mm_dtype)
    w3c = w3p.astype(mm_dtype)
    # biases stay f32 (added to f32 accumulators)

    # Batch tile: multiple of `sub`, capped by tile_cap, and split so there are
    # >= 2 grid steps whenever the batch is big enough (v7x megacore sharding).
    B_r = _round_up(B, sub)
    if B_r >= 2 * sub:
        block_b = min(tile_cap, _round_up(_cdiv(B_r, 2), sub))
    else:
        block_b = B_r
    B_pad = _round_up(B, block_b)
    if B_pad != B:
        x_p = jnp.pad(x_p, ((0, B_pad - B), (0, 0)))
    num_blocks = B_pad // block_b

    resident = lambda shape: pl.BlockSpec(shape, lambda i: (0, 0))

    mm_bytes = jnp.dtype(mm_dtype).itemsize
    cost = pl.CostEstimate(
        flops=2 * B_pad * (N * H1 + H1 * H2 + H2 * OUT_PAD),
        transcendentals=B_pad * OUT_PAD,
        bytes_accessed=(B_pad * N * mm_bytes                       # x
                        + B_pad * OUT_PAD * 4                      # out
                        + (N * H1 + H1 * H2 + H2 * OUT_PAD) * mm_bytes
                        + (H1 + H2 + OUT_PAD) * 4),                # biases
    )

    out = pl.pallas_call(
        policy_kernel,
        out_shape=jax.ShapeDtypeStruct((B_pad, OUT_PAD), jnp.float32),
        grid_spec=pltpu.PrefetchScalarGridSpec(
            num_scalar_prefetch=0,
            grid=(num_blocks,),
            in_specs=[
                pl.BlockSpec((block_b, N), lambda i: (i, 0)),      # x tile (last dim = full 7)
                resident((N, H1)),                                 # w1 (7, 128)
                resident((1, H1)),                                 # b1
                resident((H1, H2)),                                # w2 (128, 64)
                resident((1, H2)),                                 # b2
                resident((H2, OUT_PAD)),                           # w3 (64, 64)
                resident((1, OUT_PAD)),                            # b3
            ],
            out_specs=pl.BlockSpec((block_b, OUT_PAD), lambda i: (i, 0)),
        ),
        compiler_params=pltpu.CompilerParams(
            dimension_semantics=("parallel",),
            vmem_limit_bytes=48 * 1024 * 1024,
        ),
        cost_estimate=cost,
    )(x_p, w1c, b1, w2c, b2, w3c, b3p)

    # Drop batch padding and padded logit columns.
    return out[:B, :OUT]


def init_params(key):
    """Deterministic init mimicking nn.Linear's uniform(-1/sqrt(fan_in), 1/sqrt(fan_in)).
    Weights stored (in_features, out_features) so the kernel computes x @ W."""
    def linear(key, fan_in, fan_out):
        kw, kb = jax.random.split(key)
        bound = 1.0 / jnp.sqrt(fan_in)
        w = jax.random.uniform(kw, (fan_in, fan_out), jnp.float32, -bound, bound)
        b = jax.random.uniform(kb, (1, fan_out), jnp.float32, -bound, bound)
        return w, b

    k1, k2, k3 = jax.random.split(key, 3)
    w1, b1 = linear(k1, N, H1)
    w2, b2 = linear(k2, H1, H2)
    w3, b3 = linear(k3, H2, OUT)
    return (w1, b1, w2, b2, w3, b3)


def reference(x, params):
    w1, b1, w2, b2, w3, b3 = params
    h1 = jnp.maximum(x @ w1 + b1, 0.0)
    h2 = jnp.maximum(h1 @ w2 + b2, 0.0)
    return jax.nn.softmax(h2 @ w3 + b3, axis=-1)


if __name__ == "__main__":
    key = jax.random.PRNGKey(0)
    kx, kp, kx2 = jax.random.split(key, 3)
    params = init_params(kp)

    # 1) Small batch: single grid step, f32 path, strict 1e-5 parity.
    B = 8
    x = jax.random.normal(kx, (B, N), dtype=jnp.float32)
    out = jax.block_until_ready(policy_forward(x, params))
    ref = reference(x, params)
    assert out.shape == (B, OUT)
    assert jnp.allclose(out, ref, atol=1e-5, rtol=1e-5), "mismatch vs reference (B=8)"
    assert jnp.allclose(jnp.sum(out, axis=-1), 1.0, atol=1e-5), "rows must sum to 1 (B=8)"

    # 2) Non-aligned batch, small explicit tile: exercises multi-step grid,
    #    batch padding, and the resident-weight path (4 steps x 64 rows).
    B2 = 200
    x2 = jax.random.normal(kx2, (B2, N), dtype=jnp.float32)
    out2 = jax.block_until_ready(policy_forward(x2, params, tile_b_max=64))
    ref2 = reference(x2, params)
    assert out2.shape == (B2, OUT)
    assert jnp.allclose(out2, ref2, atol=1e-5, rtol=1e-5), "mismatch vs reference (B=200, tile=64)"
    assert jnp.allclose(jnp.sum(out2, axis=-1), 1.0, atol=1e-5), "rows must sum to 1 (B=200)"

    # 3) Default tile: auto-split into 2 grid steps (megacore split on v7x).
    out3 = jax.block_until_ready(policy_forward(x2, params))
    assert jnp.allclose(out3, ref2, atol=1e-5, rtol=1e-5), "mismatch vs reference (B=200, default tile)"

    # 4) bf16 matmul-input path (v6e/v7x MXU win); tolerance relaxed vs f32 ref.
    out4 = jax.block_until_ready(policy_forward(x2, params, use_bf16=True))
    assert out4.shape == (B2, OUT)
    assert jnp.allclose(out4, ref2, atol=5e-3, rtol=5e-2), "mismatch vs reference (bf16 path)"
    assert jnp.allclose(jnp.sum(out4, axis=-1), 1.0, atol=1e-5), "rows must sum to 1 (bf16 path)"

    print("KERNEL_OK")
</pallas_src>

<mosaic_0001>
module attributes {stable_mosaic.version = 11 : i64} {
  func.func @policy_kernel(%arg0: i32, %arg1: memref<8x7xf32, #tpu.memory_space<vmem>>, %arg2: memref<7x128xf32, #tpu.memory_space<vmem>>, %arg3: memref<1x128xf32, #tpu.memory_space<vmem>>, %arg4: memref<128x64xf32, #tpu.memory_space<vmem>>, %arg5: memref<1x64xf32, #tpu.memory_space<vmem>>, %arg6: memref<64x64xf32, #tpu.memory_space<vmem>>, %arg7: memref<1x64xf32, #tpu.memory_space<vmem>>, %arg8: memref<8x64xf32, #tpu.memory_space<vmem>>) attributes {dimension_semantics = [#tpu.dimension_semantics<parallel>], iteration_bounds = array<i64: 1>, scalar_prefetch = 0 : i64, scratch_operands = 0 : i64, tpu.core_type = #tpu.core_type<tc>, window_params = [{transform_indices = @transform_0, window_bounds = array<i64: 8, 7>}, {pipeline_mode = #tpu.pipeline_mode<synchronous>, transform_indices = @transform_1, window_bounds = array<i64: 7, 128>}, {pipeline_mode = #tpu.pipeline_mode<synchronous>, transform_indices = @transform_2, window_bounds = array<i64: 1, 128>}, {pipeline_mode = #tpu.pipeline_mode<synchronous>, transform_indices = @transform_3, window_bounds = array<i64: 128, 64>}, {pipeline_mode = #tpu.pipeline_mode<synchronous>, transform_indices = @transform_4, window_bounds = array<i64: 1, 64>}, {pipeline_mode = #tpu.pipeline_mode<synchronous>, transform_indices = @transform_5, window_bounds = array<i64: 64, 64>}, {pipeline_mode = #tpu.pipeline_mode<synchronous>, transform_indices = @transform_6, window_bounds = array<i64: 1, 64>}, {transform_indices = @transform_7, window_bounds = array<i64: 8, 64>}]} {
    %c0 = arith.constant 0 : index
    %c0_0 = arith.constant 0 : index
    %0 = vector.load %arg1[%c0, %c0_0] : memref<8x7xf32, #tpu.memory_space<vmem>>, vector<8x7xf32>
    %c0_1 = arith.constant 0 : index
    %c0_2 = arith.constant 0 : index
    %1 = vector.load %arg2[%c0_1, %c0_2] : memref<7x128xf32, #tpu.memory_space<vmem>>, vector<7x128xf32>
    %cst = arith.constant dense<0.000000e+00> : vector<8x128xf32>
    %2 = tpu.matmul %0, %1, %cst {dimension_numbers = #tpu.dot_dimension_numbers<[1], [0], [0], [1], [0, 0, 1, 1], [], []>} : vector<8x7xf32>, vector<7x128xf32>, vector<8x128xf32> -> vector<8x128xf32>
    %c0_3 = arith.constant 0 : index
    %c0_4 = arith.constant 0 : index
    %3 = vector.load %arg3[%c0_3, %c0_4] : memref<1x128xf32, #tpu.memory_space<vmem>>, vector<1x128xf32>
    %4 = vector.broadcast %3 : vector<1x128xf32> to vector<8x128xf32>
    %5 = arith.addf %2, %4 : vector<8x128xf32>
    %cst_5 = arith.constant 0.000000e+00 : f32
    %6 = vector.broadcast %cst_5 : f32 to vector<8x128xf32>
    %7 = arith.maximumf %5, %6 : vector<8x128xf32>
    %c0_6 = arith.constant 0 : index
    %c0_7 = arith.constant 0 : index
    %8 = vector.load %arg4[%c0_6, %c0_7] : memref<128x64xf32, #tpu.memory_space<vmem>>, vector<128x64xf32>
    %cst_8 = arith.constant dense<0.000000e+00> : vector<8x64xf32>
    %9 = tpu.matmul %7, %8, %cst_8 {dimension_numbers = #tpu.dot_dimension_numbers<[1], [0], [0], [1], [0, 0, 1, 1], [], []>} : vector<8x128xf32>, vector<128x64xf32>, vector<8x64xf32> -> vector<8x64xf32>
    %c0_9 = arith.constant 0 : index
    %c0_10 = arith.constant 0 : index
    %10 = vector.load %arg5[%c0_9, %c0_10] : memref<1x64xf32, #tpu.memory_space<vmem>>, vector<1x64xf32>
    %11 = vector.broadcast %10 : vector<1x64xf32> to vector<8x64xf32>
    %12 = arith.addf %9, %11 : vector<8x64xf32>
    %cst_11 = arith.constant 0.000000e+00 : f32
    %13 = vector.broadcast %cst_11 : f32 to vector<8x64xf32>
    %14 = arith.maximumf %12, %13 : vector<8x64xf32>
    %c0_12 = arith.constant 0 : index
    %c0_13 = arith.constant 0 : index
    %15 = vector.load %arg6[%c0_12, %c0_13] : memref<64x64xf32, #tpu.memory_space<vmem>>, vector<64x64xf32>
    %cst_14 = arith.constant dense<0.000000e+00> : vector<8x64xf32>
    %16 = tpu.matmul %14, %15, %cst_14 {dimension_numbers = #tpu.dot_dimension_numbers<[1], [0], [0], [1], [0, 0, 1, 1], [], []>} : vector<8x64xf32>, vector<64x64xf32>, vector<8x64xf32> -> vector<8x64xf32>
    %c0_15 = arith.constant 0 : index
    %c0_16 = arith.constant 0 : index
    %17 = vector.load %arg7[%c0_15, %c0_16] : memref<1x64xf32, #tpu.memory_space<vmem>>, vector<1x64xf32>
    %18 = vector.broadcast %17 : vector<1x64xf32> to vector<8x64xf32>
    %19 = arith.addf %16, %18 : vector<8x64xf32>
    %cst_17 = arith.constant dense<0xFF800000> : vector<8xf32>
    %20 = vector.multi_reduction <maximumf>, %19, %cst_17 [1] : vector<8x64xf32> to vector<8xf32>
    %21 = vector.shape_cast %20 : vector<8xf32> to vector<8x1xf32>
    %22 = vector.broadcast %21 : vector<8x1xf32> to vector<8x64xf32>
    %23 = arith.subf %19, %22 : vector<8x64xf32>
    %24 = math.exp %23 : vector<8x64xf32>
    %cst_18 = arith.constant dense<0.000000e+00> : vector<8xf32>
    %25 = vector.multi_reduction <add>, %24, %cst_18 [1] : vector<8x64xf32> to vector<8xf32>
    %26 = vector.shape_cast %25 : vector<8xf32> to vector<8x1xf32>
    %27 = tpu.reciprocal %26 : vector<8x1xf32> -> vector<8x1xf32>
    %28 = vector.broadcast %27 : vector<8x1xf32> to vector<8x64xf32>
    %29 = arith.mulf %24, %28 : vector<8x64xf32>
    %c0_19 = arith.constant 0 : index
    %c0_20 = arith.constant 0 : index
    %30 = vector.load %arg8[%c0_19, %c0_20] : memref<8x64xf32, #tpu.memory_space<vmem>>, vector<8x64xf32>
    tpu.vector_store %arg8[%c0_19, %c0_20], %29 {strides = array<i32>} : memref<8x64xf32, #tpu.memory_space<vmem>>, vector<8x64xf32>,
    return
  }
  func.func @transform_0(%arg0: i32) -> (i32, i32) {
    %c0_i32 = arith.constant 0 : i32
    %c0_i32_0 = arith.constant 0 : i32
    return %arg0, %c0_i32 : i32, i32
  }
  func.func @transform_1(%arg0: i32) -> (i32, i32) {
    %c0_i32 = arith.constant 0 : i32
    %c0_i32_0 = arith.constant 0 : i32
    %c0_i32_1 = arith.constant 0 : i32
    return %c0_i32, %c0_i32_0 : i32, i32
  }
  func.func @transform_2(%arg0: i32) -> (i32, i32) {
    %c0_i32 = arith.constant 0 : i32
    %c0_i32_0 = arith.constant 0 : i32
    %c0_i32_1 = arith.constant 0 : i32
    return %c0_i32, %c0_i32_0 : i32, i32
  }
  func.func @transform_3(%arg0: i32) -> (i32, i32) {
    %c0_i32 = arith.constant 0 : i32
    %c0_i32_0 = arith.constant 0 : i32
    %c0_i32_1 = arith.constant 0 : i32
    return %c0_i32, %c0_i32_0 : i32, i32
  }
  func.func @transform_4(%arg0: i32) -> (i32, i32) {
    %c0_i32 = arith.constant 0 : i32
    %c0_i32_0 = arith.constant 0 : i32
    %c0_i32_1 = arith.constant 0 : i32
    return %c0_i32, %c0_i32_0 : i32, i32
  }
  func.func @transform_5(%arg0: i32) -> (i32, i32) {
    %c0_i32 = arith.constant 0 : i32
    %c0_i32_0 = arith.constant 0 : i32
    %c0_i32_1 = arith.constant 0 : i32
    return %c0_i32, %c0_i32_0 : i32, i32
  }
  func.func @transform_6(%arg0: i32) -> (i32, i32) {
    %c0_i32 = arith.constant 0 : i32
    %c0_i32_0 = arith.constant 0 : i32
    %c0_i32_1 = arith.constant 0 : i32
    return %c0_i32, %c0_i32_0 : i32, i32
  }
  func.func @transform_7(%arg0: i32) -> (i32, i32) {
    %c0_i32 = arith.constant 0 : i32
    %c0_i32_0 = arith.constant 0 : i32
    return %arg0, %c0_i32 : i32, i32
  }
}

</mosaic_0001>

<llo_original>
// kernel: tpu_custom_call.1
$region0: #{tpu_custom_call.1}
  #allocation0 [shape = 'u32[]', space=smem, size = 0x4, offset = 0x4, fixed_abs, tag = 'smem constant byte address 0x4 - core index']
  #allocation1 [shape = 'u32[144,128]{1,0:T(1,128)}', space=vmem, size = 0x12000, scoped, tag = 'internal scratch']
  %s0 = inlined_call_operand.vmem [shape: f32[8,7], index: 0, kind: input, shape index: {}]
  %s1 = inlined_call_operand.vmem [shape: f32[7,128], index: 1, kind: input, shape index: {}]
  %s2 = inlined_call_operand.vmem [shape: f32[1,128], index: 2, kind: input, shape index: {}]
  %s3 = inlined_call_operand.vmem [shape: f32[128,64], index: 3, kind: input, shape index: {}]
  %s4 = inlined_call_operand.vmem [shape: f32[1,64], index: 4, kind: input, shape index: {}]
  %s5 = inlined_call_operand.vmem [shape: f32[64,64], index: 5, kind: input, shape index: {}]
  %s6 = inlined_call_operand.vmem [shape: f32[1,64], index: 6, kind: input, shape index: {}]
  %s7 = inlined_call_operand.hbm [shape: f32[8,64], index: 7, kind: output, shape index: {}]
  %s8 = sld [smem:[#allocation0]]
  $region38: #{tpu_custom_call.1} parent=0
    _
  %s10 = ssub.s32 1, %s8
  %s11 = scalar_select 0, %s10, %s8
  $region1: #{tpu_custom_call.1} parent=0
    #allocation2 [shape = 'u8[4096]{0}', space=vmem, size = 0x1000, scoped, tag = 'output window, operand 0, single buffered']
    #allocation3 [shape = 's32[1]{0}', space=sflag, size = 0x4, scoped, tag = 'scoped memory for tpu_custom_call.1']
    %12 = vsyncpa [#allocation3], 0
    // Predicated region
    $region2: #{tpu_custom_call.1} parent=1 // pred_check
      _
    $region3: #{tpu_custom_call.1} parent=1 // pred_check_branch
      %14 = sbr.rel (0) target = $region5
    $region4: #{tpu_custom_call.1} parent=1 // pred_region
      _
    $region5: #{tpu_custom_call.1} parent=1 // pred_fallthru
      _
    // Predicated region
    $region6: #{tpu_custom_call.1} parent=1 // pred_check
      _
    $region7: #{tpu_custom_call.1} parent=1 // pred_check_branch
      %16 = sbr.rel (0) target = $region9
    $region8: #{tpu_custom_call.1} parent=1 // pred_region
      _
    $region9: #{tpu_custom_call.1} parent=1 // pred_fallthru
      _
    // Predicated region
    $region10: #{tpu_custom_call.1} parent=1 // pred_check
      _
    $region11: #{tpu_custom_call.1} parent=1 // pred_check_branch
      %18 = sbr.rel (0) target = $region13
    $region12: #{tpu_custom_call.1} parent=1 // pred_region
      _
    $region13: #{tpu_custom_call.1} parent=1 // pred_fallthru
      _
    // Predicated region
    $region14: #{tpu_custom_call.1} parent=1 // pred_check
      _
    $region15: #{tpu_custom_call.1} parent=1 // pred_check_branch
      %20 = sbr.rel (0) target = $region17
    $region16: #{tpu_custom_call.1} parent=1 // pred_region
      _
    $region17: #{tpu_custom_call.1} parent=1 // pred_fallthru
      _
    // Predicated region
    $region18: #{tpu_custom_call.1} parent=1 // pred_check
      _
    $region19: #{tpu_custom_call.1} parent=1 // pred_check_branch
      %22 = sbr.rel (0) target = $region21
    $region20: #{tpu_custom_call.1} parent=1 // pred_region
      _
    $region21: #{tpu_custom_call.1} parent=1 // pred_fallthru
      _
    // Predicated region
    $region22: #{tpu_custom_call.1} parent=1 // pred_check
      _
    $region23: #{tpu_custom_call.1} parent=1 // pred_check_branch
      %24 = sbr.rel (0) target = $region25
    $region24: #{tpu_custom_call.1} parent=1 // pred_region
      _
    $region25: #{tpu_custom_call.1} parent=1 // pred_fallthru
      _
    // Predicated region
    $region26: #{tpu_custom_call.1} parent=1 // pred_check
      _
    $region27: #{tpu_custom_call.1} parent=1 // pred_check_branch
      %26 = sbr.rel (0) target = $region29
    $region28: #{tpu_custom_call.1} parent=1 // pred_region
      _
    $region29: #{tpu_custom_call.1} parent=1 // pred_fallthru
      _
    %v27 = vld [vmem:[%s0] sm:$0xff]
    %v28 = vld [vmem:[%s1] sm:$0x7f]
    %v29 = vld [vmem:[%s2] sm:$0x1]
    %v31 = vlaneseq
    %v32 = vshrl.u32 %v31, 7
    %v33 = vsub.s32 0, %v32
    %v34 = vrot.slane %v29, %v33
    %vm36 = vcmask 56320
    %v38 = vsel %vm36, %v27, 0
    %vm40 = vcmask 1046528
    %v42 = vsel %vm40, %v28, 0
    %44 = vmatprep.subr.mxu0 0.0
    %45 = vmatpush1.msra.mxu0 0.0
    %46 = vmatprep.subr.mxu0 0.0
    %47 = vmatpush1.msra.mxu0 0.0
    %48 = vmatprep.subr.mxu0 0.0
    %49 = vmatpush1.msra.mxu0 0.0
    %50 = vmatprep.subr.mxu0 0.0
    %51 = vmatpush1.msra.mxu0 0.0
    %52 = vmatprep.subr.mxu0 0.0
    %53 = vmatpush1.msra.mxu0 0.0
    %54 = vmatprep.subr.mxu0 0.0
    %55 = vmatpush1.msra.mxu0 0.0
    %56 = vmatprep.subr.mxu0 0.0
    %57 = vmatpush1.msra.mxu0 0.0
    %58 = vmatprep.subr.mxu0 0.0
    %59 = vmatpush1.msra.mxu0 0.0
    %60 = vmatprep.subr.mxu0 0.0
    %61 = vmatpush1.msra.mxu0 0.0
    %62 = vmatprep.subr.mxu0 0.0
    %63 = vmatpush1.msra.mxu0 0.0
    %64 = vmatprep.subr.mxu0 0.0
    %65 = vmatpush1.msra.mxu0 0.0
    %66 = vmatprep.subr.mxu0 0.0
    %67 = vmatpush1.msra.mxu0 0.0
    %68 = vmatprep.subr.mxu0 0.0
    %69 = vmatpush1.msra.mxu0 0.0
    %70 = vmatprep.subr.mxu0 0.0
    %71 = vmatpush1.msra.mxu0 0.0
    %72 = vmatprep.subr.mxu0 0.0
    %73 = vmatpush1.msra.mxu0 0.0
    %74 = vmatprep.subr.mxu0 0.0
    %75 = vmatpush1.msra.mxu0 %v42
    %76 = vmatprep.subr.mxu0 0.0
    %77 = vmatpush2.msra.mxu0 0.0
    %78 = vmatprep.subr.mxu0 0.0
    %79 = vmatpush2.msra.mxu0 0.0
    %80 = vmatprep.subr.mxu0 0.0
    %81 = vmatpush2.msra.mxu0 0.0
    %82 = vmatprep.subr.mxu0 0.0
    %83 = vmatpush2.msra.mxu0 0.0
    %84 = vmatprep.subr.mxu0 0.0
    %85 = vmatpush2.msra.mxu0 0.0
    %86 = vmatprep.subr.mxu0 0.0
    %87 = vmatpush2.msra.mxu0 0.0
    %88 = vmatprep.subr.mxu0 0.0
    %89 = vmatpush2.msra.mxu0 0.0
    %90 = vmatprep.subr.mxu0 0.0
    %91 = vmatpush2.msra.mxu0 0.0
    %92 = vmatprep.subr.mxu0 0.0
    %93 = vmatpush2.msra.mxu0 0.0
    %94 = vmatprep.subr.mxu0 0.0
    %95 = vmatpush2.msra.mxu0 0.0
    %96 = vmatprep.subr.mxu0 0.0
    %97 = vmatpush2.msra.mxu0 0.0
    %98 = vmatprep.subr.mxu0 0.0
    %99 = vmatpush2.msra.mxu0 0.0
    %100 = vmatprep.subr.mxu0 0.0
    %101 = vmatpush2.msra.mxu0 0.0
    %102 = vmatprep.subr.mxu0 0.0
    %103 = vmatpush2.msra.mxu0 0.0
    %104 = vmatprep.subr.mxu0 0.0
    %105 = vmatpush2.msra.mxu0 0.0
    %106 = vmatprep.subr.mxu0 0.0
    %107 = vmatpush2.msra.mxu0 0.0
    %108 = vmatprep.mubr.f32.mxu0 0.0
    %109 = vmatmul.mubr.f32.gmra.mxu0 %v38
    %v110 = vpop.f32.mrf.mxu0
    %v111 = vadd.f32 %v34, %v110
    %v112 = vpop.f32.mrf.mxu0
    %113 = vdwg.mxu0
    %v114 = vmax.f32 %v111, 0.0
    %v115 = vld [vmem:[%s3] sm:$0xff]
    %v116 = vld [vmem:[%s3 + $0x8] sm:$0xff]
    %v117 = vld [vmem:[%s3 + $0x10] sm:$0xff]
    %v118 = vld [vmem:[%s3 + $0x18] sm:$0xff]
    %v119 = vld [vmem:[%s3 + $0x20] sm:$0xff]
    %v120 = vld [vmem:[%s3 + $0x28] sm:$0xff]
    %v121 = vld [vmem:[%s3 + $0x30] sm:$0xff]
    %v122 = vld [vmem:[%s3 + $0x38] sm:$0xff]
    %v123 = vld [vmem:[%s3 + $0x40] sm:$0xff]
    %v124 = vld [vmem:[%s3 + $0x48] sm:$0xff]
    %v125 = vld [vmem:[%s3 + $0x50] sm:$0xff]
    %v126 = vld [vmem:[%s3 + $0x58] sm:$0xff]
    %v127 = vld [vmem:[%s3 + $0x60] sm:$0xff]
    %v128 = vld [vmem:[%s3 + $0x68] sm:$0xff]
    %v129 = vld [vmem:[%s3 + $0x70] sm:$0xff]
    %v130 = vld [vmem:[%s3 + $0x78] sm:$0xff]
    %v131 = vld [vmem:[%s4] sm:$0x1]
    %v133 = vlaneseq
    %v134 = vshrl.u32 %v133, 7
    %v135 = vsub.s32 0, %v134
    %v136 = vrot.slane %v131, %v135
    %138 = vmatprep.subr.mxu0 0.0
    %139 = vmatpush1.msra.mxu0 %v130
    %140 = vmatprep.subr.mxu0 0.0
    %141 = vmatpush1.msra.mxu0 %v129
    %142 = vmatprep.subr.mxu0 0.0
    %143 = vmatpush1.msra.mxu0 %v128
    %144 = vmatprep.subr.mxu0 0.0
    %145 = vmatpush1.msra.mxu0 %v127
    %146 = vmatprep.subr.mxu0 0.0
    %147 = vmatpush1.msra.mxu0 %v126
    %148 = vmatprep.subr.mxu0 0.0
    %149 = vmatpush1.msra.mxu0 %v125
    %150 = vmatprep.subr.mxu0 0.0
    %151 = vmatpush1.msra.mxu0 %v124
    %152 = vmatprep.subr.mxu0 0.0
    %153 = vmatpush1.msra.mxu0 %v123
    %154 = vmatprep.subr.mxu0 0.0
    %155 = vmatpush1.msra.mxu0 %v122
    %156 = vmatprep.subr.mxu0 0.0
    %157 = vmatpush1.msra.mxu0 %v121
    %158 = vmatprep.subr.mxu0 0.0
    %159 = vmatpush1.msra.mxu0 %v120
    %160 = vmatprep.subr.mxu0 0.0
    %161 = vmatpush1.msra.mxu0 %v119
    %162 = vmatprep.subr.mxu0 0.0
    %163 = vmatpush1.msra.mxu0 %v118
    %164 = vmatprep.subr.mxu0 0.0
    %165 = vmatpush1.msra.mxu0 %v117
    %166 = vmatprep.subr.mxu0 0.0
    %167 = vmatpush1.msra.mxu0 %v116
    %168 = vmatprep.subr.mxu0 0.0
    %169 = vmatpush1.msra.mxu0 %v115
    %170 = vmatprep.subr.mxu0 0.0
    %171 = vmatpush2.msra.mxu0 0.0
    %172 = vmatprep.subr.mxu0 0.0
    %173 = vmatpush2.msra.mxu0 0.0
    %174 = vmatprep.subr.mxu0 0.0
    %175 = vmatpush2.msra.mxu0 0.0
    %176 = vmatprep.subr.mxu0 0.0
    %177 = vmatpush2.msra.mxu0 0.0
    %178 = vmatprep.subr.mxu0 0.0
    %179 = vmatpush2.msra.mxu0 0.0
    %180 = vmatprep.subr.mxu0 0.0
    %181 = vmatpush2.msra.mxu0 0.0
    %182 = vmatprep.subr.mxu0 0.0
    %183 = vmatpush2.msra.mxu0 0.0
    %184 = vmatprep.subr.mxu0 0.0
    %185 = vmatpush2.msra.mxu0 0.0
    %186 = vmatprep.subr.mxu0 0.0
    %187 = vmatpush2.msra.mxu0 0.0
    %188 = vmatprep.subr.mxu0 0.0
    %189 = vmatpush2.msra.mxu0 0.0
    %190 = vmatprep.subr.mxu0 0.0
    %191 = vmatpush2.msra.mxu0 0.0
    %192 = vmatprep.subr.mxu0 0.0
    %193 = vmatpush2.msra.mxu0 0.0
    %194 = vmatprep.subr.mxu0 0.0
    %195 = vmatpush2.msra.mxu0 0.0
    %196 = vmatprep.subr.mxu0 0.0
    %197 = vmatpush2.msra.mxu0 0.0
    %198 = vmatprep.subr.mxu0 0.0
    %199 = vmatpush2.msra.mxu0 0.0
    %200 = vmatprep.subr.mxu0 0.0
    %201 = vmatpush2.msra.mxu0 0.0
    %202 = vmatprep.mubr.f32.mxu0 0.0
    %203 = vmatmul.mubr.f32.gmra.mxu0 %v114
    %v204 = vpop.f32.mrf.mxu0
    %v205 = vadd.f32 %v136, %v204
    %v206 = vpop.f32.mrf.mxu0
    %207 = vdwg.mxu0
    %v208 = vmax.f32 %v205, 0.0
    %v209 = vld [vmem:[%s5] sm:$0xff]
    %v210 = vld [vmem:[%s5 + $0x8] sm:$0xff]
    %v211 = vld [vmem:[%s5 + $0x10] sm:$0xff]
    %v212 = vld [vmem:[%s5 + $0x18] sm:$0xff]
    %v213 = vld [vmem:[%s5 + $0x20] sm:$0xff]
    %v214 = vld [vmem:[%s5 + $0x28] sm:$0xff]
    %v215 = vld [vmem:[%s5 + $0x30] sm:$0xff]
    %v216 = vld [vmem:[%s5 + $0x38] sm:$0xff]
    %v217 = vld [vmem:[%s6] sm:$0x1]
    %v219 = vlaneseq
    %v220 = vshrl.u32 %v219, 7
    %v221 = vsub.s32 0, %v220
    %v222 = vrot.slane %v217, %v221
    %vm224 = vcmask 523264
    %v226 = vsel %vm224, %v208, 0
    %228 = vmatprep.subr.mxu0 0.0
    %229 = vmatpush1.msra.mxu0 0.0
    %230 = vmatprep.subr.mxu0 0.0
    %231 = vmatpush1.msra.mxu0 0.0
    %232 = vmatprep.subr.mxu0 0.0
    %233 = vmatpush1.msra.mxu0 0.0
    %234 = vmatprep.subr.mxu0 0.0
    %235 = vmatpush1.msra.mxu0 0.0
    %236 = vmatprep.subr.mxu0 0.0
    %237 = vmatpush1.msra.mxu0 0.0
    %238 = vmatprep.subr.mxu0 0.0
    %239 = vmatpush1.msra.mxu0 0.0
    %240 = vmatprep.subr.mxu0 0.0
    %241 = vmatpush1.msra.mxu0 0.0
    %242 = vmatprep.subr.mxu0 0.0
    %243 = vmatpush1.msra.mxu0 0.0
    %244 = vmatprep.subr.mxu0 0.0
    %245 = vmatpush1.msra.mxu0 %v216
    %246 = vmatprep.subr.mxu0 0.0
    %247 = vmatpush1.msra.mxu0 %v215
    %248 = vmatprep.subr.mxu0 0.0
    %249 = vmatpush1.msra.mxu0 %v214
    %250 = vmatprep.subr.mxu0 0.0
    %251 = vmatpush1.msra.mxu0 %v213
    %252 = vmatprep.subr.mxu0 0.0
    %253 = vmatpush1.msra.mxu0 %v212
    %254 = vmatprep.subr.mxu0 0.0
    %255 = vmatpush1.msra.mxu0 %v211
    %256 = vmatprep.subr.mxu0 0.0
    %257 = vmatpush1.msra.mxu0 %v210
    %258 = vmatprep.subr.mxu0 0.0
    %259 = vmatpush1.msra.mxu0 %v209
    %260 = vmatprep.subr.mxu0 0.0
    %261 = vmatpush2.msra.mxu0 0.0
    %262 = vmatprep.subr.mxu0 0.0
    %263 = vmatpush2.msra.mxu0 0.0
    %264 = vmatprep.subr.mxu0 0.0
    %265 = vmatpush2.msra.mxu0 0.0
    %266 = vmatprep.subr.mxu0 0.0
    %267 = vmatpush2.msra.mxu0 0.0
    %268 = vmatprep.subr.mxu0 0.0
    %269 = vmatpush2.msra.mxu0 0.0
    %270 = vmatprep.subr.mxu0 0.0
    %271 = vmatpush2.msra.mxu0 0.0
    %272 = vmatprep.subr.mxu0 0.0
    %273 = vmatpush2.msra.mxu0 0.0
    %274 = vmatprep.subr.mxu0 0.0
    %275 = vmatpush2.msra.mxu0 0.0
    %276 = vmatprep.subr.mxu0 0.0
    %277 = vmatpush2.msra.mxu0 0.0
    %278 = vmatprep.subr.mxu0 0.0
    %279 = vmatpush2.msra.mxu0 0.0
    %280 = vmatprep.subr.mxu0 0.0
    %281 = vmatpush2.msra.mxu0 0.0
    %282 = vmatprep.subr.mxu0 0.0
    %283 = vmatpush2.msra.mxu0 0.0
    %284 = vmatprep.subr.mxu0 0.0
    %285 = vmatpush2.msra.mxu0 0.0
    %286 = vmatprep.subr.mxu0 0.0
    %287 = vmatpush2.msra.mxu0 0.0
    %288 = vmatprep.subr.mxu0 0.0
    %289 = vmatpush2.msra.mxu0 0.0
    %290 = vmatprep.subr.mxu0 0.0
    %291 = vmatpush2.msra.mxu0 0.0
    %292 = vmatprep.mubr.f32.mxu0 0.0
    %293 = vmatmul.mubr.f32.gmra.mxu0 %v226
    %v294 = vpop.f32.mrf.mxu0
    %v295 = vadd.f32 %v222, %v294
    %v296 = vpop.f32.mrf.mxu0
    %297 = vdwg.mxu0
    %v298 = vsel %vm224, %v295, -inf
    %299 = vmax.xlane.f32.xlu0 %v298
    %v300 = vpop.xlane.xlu0 %299
    %v301 = vsub.f32 %v295, %v300
    %v302 = vmul.f32 %v301, 1.442695
    %v303 = vpow.pop %v302
    %v304 = vsel %vm224, %v303, 0.0
    %305 = vadd.xlane.f32.xlu0 %v304
    %v306 = vpop.xlane.xlu0 %305
    %v307 = vrcp.pop %v306
    %v308 = vmul.f32 %v303, %v307
    %309 = vst.msk [vmem:[#allocation2] sm:$0xff] %vm224, %v308
    // Predicated region
    $region30: #{tpu_custom_call.1} parent=1 // pred_check
      _
    $region31: #{tpu_custom_call.1} parent=1 // pred_check_branch
      %311 = sbr.rel (0) target = $region33
    $region32: #{tpu_custom_call.1} parent=1 // pred_region
      %s313 = ssub.s32 128, 128
      %314 = vsyncadd [#allocation3], %s313
      %s316 = sshll.u32 [#allocation2], 4
      %s317 = int_to_ptr.vmem [resolvable:$true] %s316
      %319 = dma.vmem_to_hbm [thread:$0]  %s317, 128, %s7, [#allocation3]
    $region33: #{tpu_custom_call.1} parent=1 // pred_fallthru
      _
    // Predicated region
    $region34: #{tpu_custom_call.1} parent=1 // pred_check
      _
    $region35: #{tpu_custom_call.1} parent=1 // pred_check_branch
      %321 = sbr.rel (0) target = $region37
    $region36: #{tpu_custom_call.1} parent=1 // pred_region
      %322 = dma.done [#allocation3], 128
    $region37: #{tpu_custom_call.1} parent=1 // pred_fallthru
      _
    %323 = vsyncpa [#allocation3], 1

</llo_original>
